<compile_context>
chip_gen: v7x
topology: tpu7x:2x2x1
jax: 0.10.0
libtpu: 0.0.40
codegen_flags: <defaults>
</compile_context>

<pallas_src>
import jax
import jax.numpy as jnp
from jax.experimental import pallas as pl
from jax.experimental.pallas import tpu as pltpu

_LANE = 128
_SUB = 8


def _reproj_ba2_kernel(params_ref, n_ref, in_ref, out_ref):
    # params_ref (SMEM, (16,) f32): [Rinv row-major (9), tx, ty, tz, fx, fy, cx, cy]
    r00, r01, r02 = params_ref[0], params_ref[1], params_ref[2]
    r10, r11, r12 = params_ref[3], params_ref[4], params_ref[5]
    r20, r21, r22 = params_ref[6], params_ref[7], params_ref[8]
    tx, ty, tz = params_ref[9], params_ref[10], params_ref[11]
    fx, fy, cx, cy = params_ref[12], params_ref[13], params_ref[14], params_ref[15]

    # Per-lane validity mask (global point index < N).  Guarantees padded lanes never divide
    # by an arbitrary value and produce exactly 0 — a couple of VPU selects, fully hidden by DMA.
    tile_s = in_ref.shape[1]
    base = pl.program_id(0) * (tile_s * _LANE)
    row = jax.lax.broadcasted_iota(jnp.int32, (tile_s, _LANE), 0)
    col = jax.lax.broadcasted_iota(jnp.int32, (tile_s, _LANE), 1)
    valid = (base + row * _LANE + col) < n_ref[0]

    # in_ref block: (8, tile_s, 128); each row-plane is a dense (tile_s, 128) slab.
    px = in_ref[0]   # world x (NED forward / depth)
    py = in_ref[1]
    pz = in_ref[2]
    kau = in_ref[3]  # kp_A u
    kav = in_ref[4]  # kp_A v
    kad = in_ref[5]  # kp_A depth
    kbu = in_ref[6]  # kp_B u
    kbv = in_ref[7]  # kp_B v

    one = jnp.float32(1.0)
    zero = jnp.zeros_like(px)

    # --- frame A: identity pose -> camera point == world point (exact division: HBM-bound,
    #     so the extra VPU/EUP work is free and accuracy matches the reference) ---
    da = jnp.where(valid, px, one)
    out_ref[0] = jnp.where(valid, fx * py / da + cx - kau, zero)   # du_A
    out_ref[1] = jnp.where(valid, fy * pz / da + cy - kav, zero)   # dv_A
    out_ref[2] = jnp.where(valid, jnp.abs(px - kad), zero)         # depth err A

    # --- frame B: p_cam = R^{-1} (p - t), scalar-broadcast on the VPU (a 3x3 MXU matmul
    #     would be >97% padding) ---
    qx = px - tx
    qy = py - ty
    qz = pz - tz
    pc0 = r00 * qx + r01 * qy + r02 * qz                           # depth axis
    pc1 = r10 * qx + r11 * qy + r12 * qz
    pc2 = r20 * qx + r21 * qy + r22 * qz
    db = jnp.where(valid, pc0, one)
    out_ref[3] = jnp.where(valid, fx * pc1 / db + cx - kbu, zero)  # du_B
    out_ref[4] = jnp.where(valid, fy * pc2 / db + cy - kbv, zero)  # dv_B
    # depth_frameB == zeros: NOT written by the kernel; synthesized in the wrapper.


def _quat_to_rotmat(q):
    """pypose convention q = [qx, qy, qz, qw] -> 3x3 rotation matrix."""
    q = q / jnp.linalg.norm(q)
    x, y, z, w = q[0], q[1], q[2], q[3]
    return jnp.stack([
        jnp.stack([1 - 2 * (y * y + z * z), 2 * (x * y - z * w), 2 * (x * z + y * w)]),
        jnp.stack([2 * (x * y + z * w), 1 - 2 * (x * x + z * z), 2 * (y * z - x * w)]),
        jnp.stack([2 * (x * z - y * w), 2 * (y * z + x * w), 1 - 2 * (x * x + y * y)]),
    ])


def _pick_tile_s(s0: int) -> int:
    """Pick the point-axis tile height (in 128-lane rows). s0 is a multiple of 8."""
    try:
        kind = jax.devices()[0].device_kind.lower()
    except Exception:
        kind = ""
    if "v5 lite" in kind or "v5e" in kind:
        max_tile = 512        # v5e default scoped-VMEM limit is 16 MiB; 512 -> ~6.5 MiB dbl-buf
    else:
        max_tile = 1024       # v6e / v7x: ~13 MiB double-buffered, under 32 MiB default limit
    # v7x has 2 TensorCores/chip: ensure >=2 parallel grid steps so both cores get work.
    min_steps = 2 if ("v7" in kind and s0 >= 2 * _SUB) else 1
    steps = max(min_steps, -(-s0 // max_tile))
    tile = -(-s0 // steps)
    tile = -(-tile // _SUB) * _SUB
    return max(tile, _SUB)


@jax.jit
def reproj_ba2_forward_planes(pose7, pts_Tw, kp_A, kp_B, kp_A_d, K):
    """Core entry point.  Returns (5, N) f32 planes [duA, dvA, |ddA|, duB, dvB];
    depth_frameB is identically zero and omitted.  Downstream consumers (loss reductions,
    BA solvers) should prefer this layout to avoid the lane-hostile (2N, 3) repack."""
    N = pts_Tw.shape[0]

    # --- scalar pose / intrinsics prep (tiny; once per call) ---
    pose7 = pose7.astype(jnp.float32)
    t = pose7[:3]
    R = _quat_to_rotmat(pose7[3:7])
    Rinv = R.T                                       # SE3 inverse rotation
    params = jnp.concatenate([
        Rinv.reshape(-1), t,
        jnp.stack([K[0, 0], K[1, 1], K[0, 2], K[1, 2]]),
    ]).astype(jnp.float32)                           # (16,)
    n_valid = jnp.array([N], jnp.int32)

    # --- coordinates-first 8-row slab; with allow_input_fusion this feeds the kernel's
    #     input stream directly instead of being materialized in HBM first ---
    packed = jnp.concatenate([
        pts_Tw.T.astype(jnp.float32),                # (3, N)
        kp_A.T.astype(jnp.float32),                  # (2, N)
        kp_A_d.astype(jnp.float32).reshape(1, N),    # (1, N)
        kp_B.T.astype(jnp.float32),                  # (2, N)
    ], axis=0)                                       # (8, N)

    # --- pad N and reshape to dense (S, 128) planes, S a multiple of 8 ---
    s_needed = -(-N // _LANE)
    s0 = -(-s_needed // _SUB) * _SUB
    tile_s = _pick_tile_s(s0)
    S = -(-s0 // tile_s) * tile_s
    n_pad = S * _LANE
    pad = n_pad - N
    if pad:
        packed = jnp.pad(packed, ((0, 0), (0, pad)))   # zeros; kernel masks padded lanes
    packed = packed.reshape(8, S, _LANE)

    out_packed = pl.pallas_call(
        _reproj_ba2_kernel,
        out_shape=jax.ShapeDtypeStruct((5, S, _LANE), jnp.float32),
        grid=(S // tile_s,),
        in_specs=[
            pl.BlockSpec(memory_space=pltpu.MemorySpace.SMEM),        # params (whole, SMEM)
            pl.BlockSpec(memory_space=pltpu.MemorySpace.SMEM),        # n_valid (whole, SMEM)
            pl.BlockSpec((8, tile_s, _LANE), lambda i: (0, i, 0)),    # packed per-point inputs
        ],
        out_specs=pl.BlockSpec((5, tile_s, _LANE), lambda i: (0, i, 0)),
        compiler_params=pltpu.CompilerParams(
            dimension_semantics=("parallel",),       # independent tiles; shards TCs on v7x
            # Let XLA fuse the transpose/concat/pad producer of `packed` into the pallas
            # input stream, removing the extra HBM write + re-read of the packed slab.
            allow_input_fusion=[False, False, True],
        ),
    )(params, n_valid, packed)

    return out_packed.reshape(5, n_pad)[:, :N]       # (5, N)


@jax.jit
def reproj_ba2_forward(pose7, pts_Tw, kp_A, kp_B, kp_A_d, K):
    """PyTorch-shaped output: (2N, 3) = cat([loss_frameA, loss_frameB], dim=0).
    The repack below is a single fused XLA reshuffle; prefer reproj_ba2_forward_planes
    when the downstream consumer does not require this layout."""
    N = pts_Tw.shape[0]
    planes5 = reproj_ba2_forward_planes(pose7, pts_Tw, kp_A, kp_B, kp_A_d, K)   # (5, N)
    planes6 = jnp.concatenate([planes5, jnp.zeros((1, N), planes5.dtype)], axis=0)  # depth_B = 0
    # [frame, component, point] -> [frame, point, component] -> (2N, 3)
    return planes6.reshape(2, 3, N).transpose(0, 2, 1).reshape(2 * N, 3)


def _reference_forward(pose7, pts_Tw, kp_A, kp_B, kp_A_d, K):
    """Pure-JAX reference mirroring the PyTorch ReprojBA2.forward."""
    t = pose7[:3]
    R = _quat_to_rotmat(pose7[3:7])
    # frame A: identity pose
    pa = pts_Tw
    ua = K[0, 0] * pa[:, 1] / pa[:, 0] + K[0, 2]
    va = K[1, 1] * pa[:, 2] / pa[:, 0] + K[1, 2]
    reproj_a = jnp.stack([ua, va], axis=1) - kp_A
    depth_a = jnp.abs(pa[:, 0:1] - kp_A_d.T)                 # (N, 1)
    loss_a = jnp.concatenate([reproj_a, depth_a], axis=1)
    # frame B
    pb = (pts_Tw - t[None, :]) @ R                           # (p - t) R == R^T (p - t) per row
    ub = K[0, 0] * pb[:, 1] / pb[:, 0] + K[0, 2]
    vb = K[1, 1] * pb[:, 2] / pb[:, 0] + K[1, 2]
    reproj_b = jnp.stack([ub, vb], axis=1) - kp_B
    depth_b = jnp.zeros_like(depth_a)
    loss_b = jnp.concatenate([reproj_b, depth_b], axis=1)
    return jnp.concatenate([loss_a, loss_b], axis=0)         # (2N, 3)


if __name__ == "__main__":
    key = jax.random.PRNGKey(0)
    k1, k2, k3, k4, k5, k6 = jax.random.split(key, 6)

    N = 16  # number of matched keypoints

    # 3D keypoints in world/NED frame: x (forward/depth) kept positive.
    pts_x = jax.random.uniform(k1, (N, 1), minval=2.0, maxval=6.0)
    pts_yz = jax.random.uniform(k2, (N, 2), minval=-1.0, maxval=1.0)
    pts_Tw = jnp.concatenate([pts_x, pts_yz], axis=1).astype(jnp.float32)   # (N, 3)

    # SE3 pose (pypose order [tx,ty,tz,qx,qy,qz,qw]): small translation + small rotation.
    trans = 0.1 * jax.random.normal(k3, (3,))
    quat = jnp.array([0.05, -0.02, 0.03, 1.0])
    quat = quat / jnp.linalg.norm(quat)
    pose7 = jnp.concatenate([trans, quat]).astype(jnp.float32)              # (7,)

    # Observed pixel keypoints in frames A and B and frame-A depths.
    kp_A = jax.random.uniform(k4, (N, 2), minval=0.0, maxval=640.0).astype(jnp.float32)
    kp_B = jax.random.uniform(k5, (N, 2), minval=0.0, maxval=640.0).astype(jnp.float32)
    kp_A_d = jax.random.uniform(k6, (1, N), minval=2.0, maxval=6.0).astype(jnp.float32)
    # (kp_B_depth exists on the module but is unused by ReprojBA2.forward.)

    # Camera intrinsics.
    K = jnp.array([[320.0, 0.0, 320.0],
                   [0.0, 320.0, 240.0],
                   [0.0, 0.0, 1.0]], dtype=jnp.float32)

    out = reproj_ba2_forward(pose7, pts_Tw, kp_A, kp_B, kp_A_d, K)
    out = jax.block_until_ready(out)

    ref = _reference_forward(pose7, pts_Tw, kp_A, kp_B, kp_A_d, K)
    assert out.shape == (2 * N, 3)
    # Exact division in-kernel -> differences vs the reference are f32 rounding only.
    max_err = jnp.max(jnp.abs(out - ref))
    assert jnp.allclose(out, ref, atol=1e-3, rtol=1e-5), float(max_err)

    print("KERNEL_OK")
</pallas_src>

<mosaic_0001>
module attributes {stable_mosaic.version = 11 : i64} {
  func.func @_reproj_ba2_kernel(%arg0: i32, %arg1: memref<16xf32, #tpu.memory_space<smem>>, %arg2: memref<1xi32, #tpu.memory_space<smem>>, %arg3: memref<8x8x128xf32, #tpu.memory_space<vmem>>, %arg4: memref<5x8x128xf32, #tpu.memory_space<vmem>>) attributes {dimension_semantics = [#tpu.dimension_semantics<parallel>], iteration_bounds = array<i64: 1>, scalar_prefetch = 0 : i64, scratch_operands = 0 : i64, tpu.core_type = #tpu.core_type<tc>, window_params = [{transform_indices = @transform_0, window_bounds = array<i64: 16>}, {transform_indices = @transform_1, window_bounds = array<i64: 1>}, {transform_indices = @transform_2, window_bounds = array<i64: 8, 8, 128>}, {transform_indices = @transform_3, window_bounds = array<i64: 5, 8, 128>}]} {
    %c0 = arith.constant 0 : index
    %0 = memref.load %arg1[%c0] : memref<16xf32, #tpu.memory_space<smem>>
    %c1 = arith.constant 1 : index
    %1 = memref.load %arg1[%c1] : memref<16xf32, #tpu.memory_space<smem>>
    %c2 = arith.constant 2 : index
    %2 = memref.load %arg1[%c2] : memref<16xf32, #tpu.memory_space<smem>>
    %c3 = arith.constant 3 : index
    %3 = memref.load %arg1[%c3] : memref<16xf32, #tpu.memory_space<smem>>
    %c4 = arith.constant 4 : index
    %4 = memref.load %arg1[%c4] : memref<16xf32, #tpu.memory_space<smem>>
    %c5 = arith.constant 5 : index
    %5 = memref.load %arg1[%c5] : memref<16xf32, #tpu.memory_space<smem>>
    %c6 = arith.constant 6 : index
    %6 = memref.load %arg1[%c6] : memref<16xf32, #tpu.memory_space<smem>>
    %c7 = arith.constant 7 : index
    %7 = memref.load %arg1[%c7] : memref<16xf32, #tpu.memory_space<smem>>
    %c8 = arith.constant 8 : index
    %8 = memref.load %arg1[%c8] : memref<16xf32, #tpu.memory_space<smem>>
    %c9 = arith.constant 9 : index
    %9 = memref.load %arg1[%c9] : memref<16xf32, #tpu.memory_space<smem>>
    %c10 = arith.constant 10 : index
    %10 = memref.load %arg1[%c10] : memref<16xf32, #tpu.memory_space<smem>>
    %c11 = arith.constant 11 : index
    %11 = memref.load %arg1[%c11] : memref<16xf32, #tpu.memory_space<smem>>
    %c12 = arith.constant 12 : index
    %12 = memref.load %arg1[%c12] : memref<16xf32, #tpu.memory_space<smem>>
    %c13 = arith.constant 13 : index
    %13 = memref.load %arg1[%c13] : memref<16xf32, #tpu.memory_space<smem>>
    %c14 = arith.constant 14 : index
    %14 = memref.load %arg1[%c14] : memref<16xf32, #tpu.memory_space<smem>>
    %c15 = arith.constant 15 : index
    %15 = memref.load %arg1[%c15] : memref<16xf32, #tpu.memory_space<smem>>
    %c1024_i32 = arith.constant 1024 : i32
    %16 = arith.muli %arg0, %c1024_i32 : i32
    %17 = tpu.iota {dimensions = array<i32: 0>} : vector<8x128xi32>
    %18 = tpu.iota {dimensions = array<i32: 1>} : vector<8x128xi32>
    %c128_i32 = arith.constant 128 : i32
    %19 = vector.broadcast %c128_i32 : i32 to vector<8x128xi32>
    %20 = arith.muli %17, %19 : vector<8x128xi32>
    %21 = vector.broadcast %16 : i32 to vector<8x128xi32>
    %22 = arith.addi %21, %20 : vector<8x128xi32>
    %23 = arith.addi %22, %18 : vector<8x128xi32>
    %c0_0 = arith.constant 0 : index
    %24 = memref.load %arg2[%c0_0] : memref<1xi32, #tpu.memory_space<smem>>
    %25 = vector.broadcast %24 : i32 to vector<8x128xi32>
    %26 = arith.cmpi slt, %23, %25 : vector<8x128xi32>
    %c0_1 = arith.constant 0 : index
    %c0_2 = arith.constant 0 : index
    %c0_3 = arith.constant 0 : index
    %27 = vector.load %arg3[%c0_1, %c0_2, %c0_3] : memref<8x8x128xf32, #tpu.memory_space<vmem>>, vector<1x8x128xf32>
    %28 = vector.shape_cast %27 : vector<1x8x128xf32> to vector<8x128xf32>
    %c1_4 = arith.constant 1 : index
    %c0_5 = arith.constant 0 : index
    %c0_6 = arith.constant 0 : index
    %29 = vector.load %arg3[%c1_4, %c0_5, %c0_6] : memref<8x8x128xf32, #tpu.memory_space<vmem>>, vector<1x8x128xf32>
    %30 = vector.shape_cast %29 : vector<1x8x128xf32> to vector<8x128xf32>
    %c2_7 = arith.constant 2 : index
    %c0_8 = arith.constant 0 : index
    %c0_9 = arith.constant 0 : index
    %31 = vector.load %arg3[%c2_7, %c0_8, %c0_9] : memref<8x8x128xf32, #tpu.memory_space<vmem>>, vector<1x8x128xf32>
    %32 = vector.shape_cast %31 : vector<1x8x128xf32> to vector<8x128xf32>
    %c3_10 = arith.constant 3 : index
    %c0_11 = arith.constant 0 : index
    %c0_12 = arith.constant 0 : index
    %33 = vector.load %arg3[%c3_10, %c0_11, %c0_12] : memref<8x8x128xf32, #tpu.memory_space<vmem>>, vector<1x8x128xf32>
    %34 = vector.shape_cast %33 : vector<1x8x128xf32> to vector<8x128xf32>
    %c4_13 = arith.constant 4 : index
    %c0_14 = arith.constant 0 : index
    %c0_15 = arith.constant 0 : index
    %35 = vector.load %arg3[%c4_13, %c0_14, %c0_15] : memref<8x8x128xf32, #tpu.memory_space<vmem>>, vector<1x8x128xf32>
    %36 = vector.shape_cast %35 : vector<1x8x128xf32> to vector<8x128xf32>
    %c5_16 = arith.constant 5 : index
    %c0_17 = arith.constant 0 : index
    %c0_18 = arith.constant 0 : index
    %37 = vector.load %arg3[%c5_16, %c0_17, %c0_18] : memref<8x8x128xf32, #tpu.memory_space<vmem>>, vector<1x8x128xf32>
    %38 = vector.shape_cast %37 : vector<1x8x128xf32> to vector<8x128xf32>
    %c6_19 = arith.constant 6 : index
    %c0_20 = arith.constant 0 : index
    %c0_21 = arith.constant 0 : index
    %39 = vector.load %arg3[%c6_19, %c0_20, %c0_21] : memref<8x8x128xf32, #tpu.memory_space<vmem>>, vector<1x8x128xf32>
    %40 = vector.shape_cast %39 : vector<1x8x128xf32> to vector<8x128xf32>
    %c7_22 = arith.constant 7 : index
    %c0_23 = arith.constant 0 : index
    %c0_24 = arith.constant 0 : index
    %41 = vector.load %arg3[%c7_22, %c0_23, %c0_24] : memref<8x8x128xf32, #tpu.memory_space<vmem>>, vector<1x8x128xf32>
    %42 = vector.shape_cast %41 : vector<1x8x128xf32> to vector<8x128xf32>
    %cst = arith.constant 0.000000e+00 : f32
    %43 = vector.broadcast %cst : f32 to vector<8x128xf32>
    %cst_25 = arith.constant 1.000000e+00 : f32
    %44 = vector.broadcast %cst_25 : f32 to vector<8x128xf32>
    %45 = arith.select %26, %28, %44 : vector<8x128xi1>, vector<8x128xf32>
    %46 = vector.broadcast %12 : f32 to vector<8x128xf32>
    %47 = arith.mulf %46, %30 : vector<8x128xf32>
    %48 = arith.divf %47, %45 : vector<8x128xf32>
    %49 = vector.broadcast %14 : f32 to vector<8x128xf32>
    %50 = arith.addf %48, %49 : vector<8x128xf32>
    %51 = arith.subf %50, %34 : vector<8x128xf32>
    %52 = arith.select %26, %51, %43 : vector<8x128xi1>, vector<8x128xf32>
    %c0_26 = arith.constant 0 : index
    %c0_27 = arith.constant 0 : index
    %c0_28 = arith.constant 0 : index
    %53 = vector.load %arg4[%c0_26, %c0_27, %c0_28] : memref<5x8x128xf32, #tpu.memory_space<vmem>>, vector<1x8x128xf32>
    %54 = vector.shape_cast %53 : vector<1x8x128xf32> to vector<8x128xf32>
    %55 = vector.shape_cast %52 : vector<8x128xf32> to vector<1x8x128xf32>
    tpu.vector_store %arg4[%c0_26, %c0_27, %c0_28], %55 {strides = array<i32>} : memref<5x8x128xf32, #tpu.memory_space<vmem>>, vector<1x8x128xf32>,
    %56 = vector.broadcast %13 : f32 to vector<8x128xf32>
    %57 = arith.mulf %56, %32 : vector<8x128xf32>
    %58 = arith.divf %57, %45 : vector<8x128xf32>
    %59 = vector.broadcast %15 : f32 to vector<8x128xf32>
    %60 = arith.addf %58, %59 : vector<8x128xf32>
    %61 = arith.subf %60, %36 : vector<8x128xf32>
    %62 = arith.select %26, %61, %43 : vector<8x128xi1>, vector<8x128xf32>
    %c1_29 = arith.constant 1 : index
    %c0_30 = arith.constant 0 : index
    %c0_31 = arith.constant 0 : index
    %63 = vector.load %arg4[%c1_29, %c0_30, %c0_31] : memref<5x8x128xf32, #tpu.memory_space<vmem>>, vector<1x8x128xf32>
    %64 = vector.shape_cast %63 : vector<1x8x128xf32> to vector<8x128xf32>
    %65 = vector.shape_cast %62 : vector<8x128xf32> to vector<1x8x128xf32>
    tpu.vector_store %arg4[%c1_29, %c0_30, %c0_31], %65 {strides = array<i32>} : memref<5x8x128xf32, #tpu.memory_space<vmem>>, vector<1x8x128xf32>,
    %66 = arith.subf %28, %38 : vector<8x128xf32>
    %67 = math.absf %66 : vector<8x128xf32>
    %68 = arith.select %26, %67, %43 : vector<8x128xi1>, vector<8x128xf32>
    %c2_32 = arith.constant 2 : index
    %c0_33 = arith.constant 0 : index
    %c0_34 = arith.constant 0 : index
    %69 = vector.load %arg4[%c2_32, %c0_33, %c0_34] : memref<5x8x128xf32, #tpu.memory_space<vmem>>, vector<1x8x128xf32>
    %70 = vector.shape_cast %69 : vector<1x8x128xf32> to vector<8x128xf32>
    %71 = vector.shape_cast %68 : vector<8x128xf32> to vector<1x8x128xf32>
    tpu.vector_store %arg4[%c2_32, %c0_33, %c0_34], %71 {strides = array<i32>} : memref<5x8x128xf32, #tpu.memory_space<vmem>>, vector<1x8x128xf32>,
    %72 = vector.broadcast %9 : f32 to vector<8x128xf32>
    %73 = arith.subf %28, %72 : vector<8x128xf32>
    %74 = vector.broadcast %10 : f32 to vector<8x128xf32>
    %75 = arith.subf %30, %74 : vector<8x128xf32>
    %76 = vector.broadcast %11 : f32 to vector<8x128xf32>
    %77 = arith.subf %32, %76 : vector<8x128xf32>
    %78 = vector.broadcast %0 : f32 to vector<8x128xf32>
    %79 = arith.mulf %78, %73 : vector<8x128xf32>
    %80 = vector.broadcast %1 : f32 to vector<8x128xf32>
    %81 = arith.mulf %80, %75 : vector<8x128xf32>
    %82 = arith.addf %79, %81 : vector<8x128xf32>
    %83 = vector.broadcast %2 : f32 to vector<8x128xf32>
    %84 = arith.mulf %83, %77 : vector<8x128xf32>
    %85 = arith.addf %82, %84 : vector<8x128xf32>
    %86 = vector.broadcast %3 : f32 to vector<8x128xf32>
    %87 = arith.mulf %86, %73 : vector<8x128xf32>
    %88 = vector.broadcast %4 : f32 to vector<8x128xf32>
    %89 = arith.mulf %88, %75 : vector<8x128xf32>
    %90 = arith.addf %87, %89 : vector<8x128xf32>
    %91 = vector.broadcast %5 : f32 to vector<8x128xf32>
    %92 = arith.mulf %91, %77 : vector<8x128xf32>
    %93 = arith.addf %90, %92 : vector<8x128xf32>
    %94 = vector.broadcast %6 : f32 to vector<8x128xf32>
    %95 = arith.mulf %94, %73 : vector<8x128xf32>
    %96 = vector.broadcast %7 : f32 to vector<8x128xf32>
    %97 = arith.mulf %96, %75 : vector<8x128xf32>
    %98 = arith.addf %95, %97 : vector<8x128xf32>
    %99 = vector.broadcast %8 : f32 to vector<8x128xf32>
    %100 = arith.mulf %99, %77 : vector<8x128xf32>
    %101 = arith.addf %98, %100 : vector<8x128xf32>
    %cst_35 = arith.constant 1.000000e+00 : f32
    %102 = vector.broadcast %cst_35 : f32 to vector<8x128xf32>
    %103 = arith.select %26, %85, %102 : vector<8x128xi1>, vector<8x128xf32>
    %104 = vector.broadcast %12 : f32 to vector<8x128xf32>
    %105 = arith.mulf %104, %93 : vector<8x128xf32>
    %106 = arith.divf %105, %103 : vector<8x128xf32>
    %107 = vector.broadcast %14 : f32 to vector<8x128xf32>
    %108 = arith.addf %106, %107 : vector<8x128xf32>
    %109 = arith.subf %108, %40 : vector<8x128xf32>
    %110 = arith.select %26, %109, %43 : vector<8x128xi1>, vector<8x128xf32>
    %c3_36 = arith.constant 3 : index
    %c0_37 = arith.constant 0 : index
    %c0_38 = arith.constant 0 : index
    %111 = vector.load %arg4[%c3_36, %c0_37, %c0_38] : memref<5x8x128xf32, #tpu.memory_space<vmem>>, vector<1x8x128xf32>
    %112 = vector.shape_cast %111 : vector<1x8x128xf32> to vector<8x128xf32>
    %113 = vector.shape_cast %110 : vector<8x128xf32> to vector<1x8x128xf32>
    tpu.vector_store %arg4[%c3_36, %c0_37, %c0_38], %113 {strides = array<i32>} : memref<5x8x128xf32, #tpu.memory_space<vmem>>, vector<1x8x128xf32>,
    %114 = vector.broadcast %13 : f32 to vector<8x128xf32>
    %115 = arith.mulf %114, %101 : vector<8x128xf32>
    %116 = arith.divf %115, %103 : vector<8x128xf32>
    %117 = vector.broadcast %15 : f32 to vector<8x128xf32>
    %118 = arith.addf %116, %117 : vector<8x128xf32>
    %119 = arith.subf %118, %42 : vector<8x128xf32>
    %120 = arith.select %26, %119, %43 : vector<8x128xi1>, vector<8x128xf32>
    %c4_39 = arith.constant 4 : index
    %c0_40 = arith.constant 0 : index
    %c0_41 = arith.constant 0 : index
    %121 = vector.load %arg4[%c4_39, %c0_40, %c0_41] : memref<5x8x128xf32, #tpu.memory_space<vmem>>, vector<1x8x128xf32>
    %122 = vector.shape_cast %121 : vector<1x8x128xf32> to vector<8x128xf32>
    %123 = vector.shape_cast %120 : vector<8x128xf32> to vector<1x8x128xf32>
    tpu.vector_store %arg4[%c4_39, %c0_40, %c0_41], %123 {strides = array<i32>} : memref<5x8x128xf32, #tpu.memory_space<vmem>>, vector<1x8x128xf32>,
    return
  }
  func.func @transform_0(%arg0: i32) -> i32 {
    %c0_i32 = arith.constant 0 : i32
    %c0_i32_0 = arith.constant 0 : i32
    return %c0_i32 : i32
  }
  func.func @transform_1(%arg0: i32) -> i32 {
    %c0_i32 = arith.constant 0 : i32
    %c0_i32_0 = arith.constant 0 : i32
    return %c0_i32 : i32
  }
  func.func @transform_2(%arg0: i32) -> (i32, i32, i32) {
    %c0_i32 = arith.constant 0 : i32
    %c0_i32_0 = arith.constant 0 : i32
    %c0_i32_1 = arith.constant 0 : i32
    return %c0_i32, %arg0, %c0_i32_0 : i32, i32, i32
  }
  func.func @transform_3(%arg0: i32) -> (i32, i32, i32) {
    %c0_i32 = arith.constant 0 : i32
    %c0_i32_0 = arith.constant 0 : i32
    %c0_i32_1 = arith.constant 0 : i32
    return %c0_i32, %arg0, %c0_i32_0 : i32, i32, i32
  }
}

</mosaic_0001>

<llo_original>
// kernel: reproj_ba2_forward_planes.2
$region0: #{reproj_ba2_forward_planes.2}
  #allocation0 [shape = 'u32[]', space=smem, size = 0x4, offset = 0x4, fixed_abs, tag = 'smem constant byte address 0x4 - core index']
  #allocation1 [shape = 'u32[144,128]{1,0:T(1,128)}', space=vmem, size = 0x12000, scoped, tag = 'internal scratch']
  #allocation2 [shape = 's32[1]{0:T(128)S(6)}', space=smem, size = 0x200, scoped, tag = 'scoped memory for reproj_ba2_forward_planes.2']
  %s0 = inlined_call_operand.vmem [shape: f32[16], index: 0, kind: input, shape index: {}]
  %s1 = inlined_call_operand.<no memory space> [shape: s32[1], index: 1, kind: input, shape index: {}]
  %s2 = inlined_call_operand.vmem [shape: f32[1,8,8,128], index: 2, kind: input, shape index: {}]
  %s3 = inlined_call_operand.vmem [shape: f32[5,8,128], index: 3, kind: output, shape index: {}]
  %s4 = sld [smem:[#allocation0]]
  $region26: #{reproj_ba2_forward_planes.2} parent=0
    _
  %s6 = ssub.s32 1, %s4
  %s7 = scalar_select 0, %s6, %s4
  %8 = sst [smem:[#allocation2]] %s1
  $region1: #{reproj_ba2_forward_planes.2} parent=0
    #allocation3 [shape = 'u8[512]{0}', space=smem, size = 0x200, scoped, tag = 'input window, operand 0, single buffered']
    #allocation4 [shape = 's32[1]{0}', space=sflag, size = 0x4, scoped, tag = 'scoped memory for reproj_ba2_forward_planes.2']
    #allocation5 [shape = 'u8[32768]{0}', space=vmem, size = 0x8000, dematerialized = true, scoped, tag = 'FusionAdapter Buffer %fusion.1 = f32[8,8,128]{2,1,0:T(8,128)} fusion(%param_2.1), kind=kLoop, calls=%fused_computation.2.clone, metadata={op_name="jit(reproj_ba2_forward_planes)/reshape" stack_frame_id=59}']
    %9 = vsyncpa [#allocation4], 0
    // Predicated region
    $region2: #{reproj_ba2_forward_planes.2} parent=1 // pred_check
      _
    $region3: #{reproj_ba2_forward_planes.2} parent=1 // pred_check_branch
      %11 = sbr.rel (0) target = $region5
    $region4: #{reproj_ba2_forward_planes.2} parent=1 // pred_region
      %s13 = ssub.s32 16, 16
      %14 = vsyncadd [#allocation4], %s13
      %s16 = sshll.u32 %s0, 4
      %s17 = int_to_ptr.vmem [resolvable:$true] %s16
      %19 = dma.vmem_to_smem %s17, 16, [#allocation3], [#allocation4]
    $region5: #{reproj_ba2_forward_planes.2} parent=1 // pred_fallthru
      _
    // Predicated region
    $region6: #{reproj_ba2_forward_planes.2} parent=1 // pred_check
      _
    $region7: #{reproj_ba2_forward_planes.2} parent=1 // pred_check_branch
      %21 = sbr.rel (0) target = $region9
    $region8: #{reproj_ba2_forward_planes.2} parent=1 // pred_region
      _
    $region9: #{reproj_ba2_forward_planes.2} parent=1 // pred_fallthru
      _
    // Predicated region
    $region10: #{reproj_ba2_forward_planes.2} parent=1 // pred_check
      _
    $region11: #{reproj_ba2_forward_planes.2} parent=1 // pred_check_branch
      %23 = sbr.rel (0) target = $region13
    $region12: #{reproj_ba2_forward_planes.2} parent=1 // pred_region
      _
    $region13: #{reproj_ba2_forward_planes.2} parent=1 // pred_fallthru
      _
    // Predicated region
    $region14: #{reproj_ba2_forward_planes.2} parent=1 // pred_check
      _
    $region15: #{reproj_ba2_forward_planes.2} parent=1 // pred_check_branch
      %25 = sbr.rel (0) target = $region17
    $region16: #{reproj_ba2_forward_planes.2} parent=1 // pred_region
      %26 = dma.done [#allocation4], 16
    $region17: #{reproj_ba2_forward_planes.2} parent=1 // pred_fallthru
      _
    %27 = sfence
    %v28 = vld [vmem:[%s2] sm:$0xff]
    %30 = vst [vmem:[#allocation5] sm:$0xff] %v28
    %s31 = scalar_lea.vmem %s2, 8
    %v32 = vld [vmem:[%s31] sm:$0xff]
    %s33 = scalar_lea.vmem [#allocation5], 8
    %35 = vst [vmem:[%s33] sm:$0xff] %v32
    %s36 = scalar_lea.vmem %s2, 16
    %v37 = vld [vmem:[%s36] sm:$0xff]
    %s38 = scalar_lea.vmem [#allocation5], 16
    %40 = vst [vmem:[%s38] sm:$0xff] %v37
    %s41 = scalar_lea.vmem %s2, 24
    %v42 = vld [vmem:[%s41] sm:$0xff]
    %s43 = scalar_lea.vmem [#allocation5], 24
    %45 = vst [vmem:[%s43] sm:$0xff] %v42
    %s46 = scalar_lea.vmem %s2, 32
    %v47 = vld [vmem:[%s46] sm:$0xff]
    %s48 = scalar_lea.vmem [#allocation5], 32
    %50 = vst [vmem:[%s48] sm:$0xff] %v47
    %s51 = scalar_lea.vmem %s2, 40
    %v52 = vld [vmem:[%s51] sm:$0xff]
    %s53 = scalar_lea.vmem [#allocation5], 40
    %55 = vst [vmem:[%s53] sm:$0xff] %v52
    %s56 = scalar_lea.vmem %s2, 48
    %v57 = vld [vmem:[%s56] sm:$0xff]
    %s58 = scalar_lea.vmem [#allocation5], 48
    %60 = vst [vmem:[%s58] sm:$0xff] %v57
    %s61 = scalar_lea.vmem %s2, 56
    %v62 = vld [vmem:[%s61] sm:$0xff]
    %s63 = scalar_lea.vmem [#allocation5], 56
    %65 = vst [vmem:[%s63] sm:$0xff] %v62
    %s66 = sld [smem:[#allocation3]]
    %s67 = sld [smem:[#allocation3 + $0x1]]
    %s68 = sld [smem:[#allocation3 + $0x2]]
    %s69 = sld [smem:[#allocation3 + $0x3]]
    %s70 = sld [smem:[#allocation3 + $0x4]]
    %s71 = sld [smem:[#allocation3 + $0x5]]
    %s72 = sld [smem:[#allocation3 + $0x6]]
    %s73 = sld [smem:[#allocation3 + $0x7]]
    %s74 = sld [smem:[#allocation3 + $0x8]]
    %s75 = sld [smem:[#allocation3 + $0x9]]
    %s76 = sld [smem:[#allocation3 + $0xa]]
    %s77 = sld [smem:[#allocation3 + $0xb]]
    %s78 = sld [smem:[#allocation3 + $0xc]]
    %s79 = sld [smem:[#allocation3 + $0xd]]
    %s80 = sld [smem:[#allocation3 + $0xe]]
    %s81 = sld [smem:[#allocation3 + $0xf]]
    %s82 = smul.u32 0, 1024
    %v83 = vlaneseq
    %v84 = vshrl.u32 %v83, 7
    %v85 = vlaneseq
    %v86 = vand.u32 %v85, 127
    %v87 = vmul.u32 %v84, 128
    %v88 = vstv %s82
    %v89 = vadd.s32 %v88, %v87
    %v90 = vadd.s32 %v89, %v86
    %s91 = sld [smem:[#allocation2]]
    %v92 = vstv %s91
    %vm93 = vcmp.lt.s32.totalorder %v90, %v92
    %v94 = vld [vmem:[#allocation5] sm:$0xff]
    %s95 = scalar_lea.vmem [#allocation5], 8
    %v96 = vld [vmem:[%s95] sm:$0xff]
    %s97 = scalar_lea.vmem [#allocation5], 16
    %v98 = vld [vmem:[%s97] sm:$0xff]
    %s99 = scalar_lea.vmem [#allocation5], 24
    %v100 = vld [vmem:[%s99] sm:$0xff]
    %s101 = scalar_lea.vmem [#allocation5], 32
    %v102 = vld [vmem:[%s101] sm:$0xff]
    %s103 = scalar_lea.vmem [#allocation5], 40
    %v104 = vld [vmem:[%s103] sm:$0xff]
    %s105 = scalar_lea.vmem [#allocation5], 48
    %v106 = vld [vmem:[%s105] sm:$0xff]
    %s107 = scalar_lea.vmem [#allocation5], 56
    %v108 = vld [vmem:[%s107] sm:$0xff]
    %v109 = vsel %vm93, %v94, 1.0
    %v110 = vstv %s78
    %v111 = vmul.f32 %v110, %v96
    %v112 = vrcp.pop %v109
    %v113 = vmul.f32 %v111, %v112
    %v114 = vstv %s80
    %v115 = vadd.f32 %v113, %v114
    %v116 = vsub.f32 %v115, %v100
    %v117 = vsel %vm93, %v116, 0.0
    %118 = vst [vmem:[%s3] sm:$0xff] %v117
    %v119 = vstv %s79
    %v120 = vmul.f32 %v119, %v98
    %v121 = vmul.f32 %v120, %v112
    %v122 = vstv %s81
    %v123 = vadd.f32 %v121, %v122
    %v124 = vsub.f32 %v123, %v102
    %v125 = vsel %vm93, %v124, 0.0
    %s126 = scalar_lea.vmem %s3, 8
    %127 = vst [vmem:[%s126] sm:$0xff] %v125
    %v128 = vsub.f32 %v94, %v104
    %v129 = vand.u32 2147483647, %v128
    %v130 = vsel %vm93, %v129, 0.0
    %s131 = scalar_lea.vmem %s3, 16
    %132 = vst [vmem:[%s131] sm:$0xff] %v130
    %v133 = vstv %s75
    %v134 = vsub.f32 %v94, %v133
    %v135 = vstv %s76
    %v136 = vsub.f32 %v96, %v135
    %v137 = vstv %s77
    %v138 = vsub.f32 %v98, %v137
    %v139 = vstv %s66
    %v140 = vmul.f32 %v139, %v134
    %v141 = vstv %s67
    %v142 = vmul.f32 %v141, %v136
    %v143 = vadd.f32 %v140, %v142
    %v144 = vstv %s68
    %v145 = vmul.f32 %v144, %v138
    %v146 = vadd.f32 %v143, %v145
    %v147 = vstv %s69
    %v148 = vmul.f32 %v147, %v134
    %v149 = vstv %s70
    %v150 = vmul.f32 %v149, %v136
    %v151 = vadd.f32 %v148, %v150
    %v152 = vstv %s71
    %v153 = vmul.f32 %v152, %v138
    %v154 = vadd.f32 %v151, %v153
    %v155 = vstv %s72
    %v156 = vmul.f32 %v155, %v134
    %v157 = vstv %s73
    %v158 = vmul.f32 %v157, %v136
    %v159 = vadd.f32 %v156, %v158
    %v160 = vstv %s74
    %v161 = vmul.f32 %v160, %v138
    %v162 = vadd.f32 %v159, %v161
    %v163 = vsel %vm93, %v146, 1.0
    %v164 = vmul.f32 %v110, %v154
    %v165 = vrcp.pop %v163
    %v166 = vmul.f32 %v164, %v165
    %v167 = vadd.f32 %v166, %v114
    %v168 = vsub.f32 %v167, %v106
    %v169 = vsel %vm93, %v168, 0.0
    %s170 = scalar_lea.vmem %s3, 24
    %171 = vst [vmem:[%s170] sm:$0xff] %v169
    %v172 = vmul.f32 %v119, %v162
    %v173 = vmul.f32 %v172, %v165
    %v174 = vadd.f32 %v173, %v122
    %v175 = vsub.f32 %v174, %v108
    %v176 = vsel %vm93, %v175, 0.0
    %s177 = scalar_lea.vmem %s3, 32
    %178 = vst [vmem:[%s177] sm:$0xff] %v176
    // Predicated region
    $region18: #{reproj_ba2_forward_planes.2} parent=1 // pred_check
      _
    $region19: #{reproj_ba2_forward_planes.2} parent=1 // pred_check_branch
      %180 = sbr.rel (0) target = $region21
    $region20: #{reproj_ba2_forward_planes.2} parent=1 // pred_region
      _
    $region21: #{reproj_ba2_forward_planes.2} parent=1 // pred_fallthru
      _
    // Predicated region
    $region22: #{reproj_ba2_forward_planes.2} parent=1 // pred_check
      _
    $region23: #{reproj_ba2_forward_planes.2} parent=1 // pred_check_branch
      %182 = sbr.rel (0) target = $region25
    $region24: #{reproj_ba2_forward_planes.2} parent=1 // pred_region
      _
    $region25: #{reproj_ba2_forward_planes.2} parent=1 // pred_fallthru
      _
    %183 = vsyncpa [#allocation4], 1

</llo_original>
